<compile_context>
chip_gen: v7x
topology: tpu7x:2x2x1
jax: 0.10.0
libtpu: 0.0.40
codegen_flags: <defaults>
</compile_context>

<pallas_src>
import functools
import math

import jax
import jax.numpy as jnp
from jax import lax
from jax.experimental import pallas as pl
from jax.experimental.pallas import tpu as pltpu

LANES = 128
_LOG_CLAMP = math.log(1e-12)   # torch.clamp(pred, 1e-12) -> log lower bound


# --------------------------------------------------------------------------
# Tiling helpers (all trace-time Python)
# --------------------------------------------------------------------------
def _chip_caps():
    try:
        kind = jax.devices()[0].device_kind.lower()
    except Exception:
        kind = ""
    if ("v5 lite" in kind) or ("v5e" in kind) or ("v5lite" in kind):
        # 16 MiB default scoped VMEM -> smaller blocks.
        return {"focal_rows": 4096, "sl1_rows": 2048, "vmem_cap": 100 << 20}
    if "v7" in kind:
        # 64 MiB physical VMEM per TC -> keep the budget conservative.
        return {"focal_rows": 8192, "sl1_rows": 4096, "vmem_cap": 48 << 20}
    return {"focal_rows": 8192, "sl1_rows": 4096, "vmem_cap": 100 << 20}


def _row_align(tensors):
    a = 8
    for t in tensors:
        itemsize = jnp.dtype(t.dtype).itemsize
        a = max(a, 8 * max(1, 4 // max(1, itemsize)))   # f32:8, bf16:16, i8:32
    return a


def _sub_rows(block_rows, align):
    for s in (512, 256, 128, 64, 32, 16, 8):
        if s >= align and block_rows % s == 0:
            return s
    return block_rows


def _tiling(rows, cap, align):
    """Pick (total_rows, block_rows, ncores, steps_per_core)."""
    cap = max(align, min(cap, rows))
    cap -= cap % align
    best = align
    for br in range(cap, align - 1, -align):
        if rows % br == 0:
            best = br
            break
    if best == rows or best * 8 >= cap:
        block_rows, total_rows = best, rows
    else:
        # Poor divisor structure: pad rows up to a clean multiple of the cap.
        # Padded elements are neutralized by per-tensor pad values, no masking.
        block_rows = cap
        total_rows = -(-rows // cap) * cap
    steps = total_rows // block_rows
    # Leading parallel axis of 2 lets both v7x TensorCores run; on 1-TC chips
    # it is just two sequential outer steps (negligible).
    if steps >= 2 and steps % 2 == 0:
        return total_rows, block_rows, 2, steps // 2
    if steps == 1 and block_rows >= 2 * align and block_rows % (2 * align) == 0:
        return total_rows, block_rows // 2, 2, 1
    return total_rows, block_rows, 1, steps


def _prep_group(tensors, pad_values, rows_cap):
    """Flatten every tensor to (total_rows, 128) with neutral tail padding."""
    n = int(tensors[0].size)
    for t in tensors:
        assert int(t.size) == n, "fused tensors must have equal element count"
    align = _row_align(tensors)
    rows = -(-n // LANES)
    rows = -(-rows // align) * align
    total_rows, block_rows, ncores, spc = _tiling(rows, rows_cap, align)
    padded_n = total_rows * LANES
    tiled = []
    for t, pv in zip(tensors, pad_values):
        flat = t.reshape(-1)                       # native dtype, no astype copy
        if padded_n != n:
            flat = jnp.pad(flat, (0, padded_n - n), constant_values=pv)
        tiled.append(flat.reshape(total_rows, LANES))
    return tiled, block_rows, _sub_rows(block_rows, align), ncores, spc


# --------------------------------------------------------------------------
# In-kernel helpers
# --------------------------------------------------------------------------
def _fold(v, sub_rows):
    """(sub_rows, 128) -> (8, 128) partial sums (pure VPU vreg adds)."""
    return v.reshape(sub_rows // 8, 8, LANES).sum(axis=0)


# --------------------------------------------------------------------------
# Kernels
# --------------------------------------------------------------------------
def _focal_kernel(logit_ref, gt_ref, out_ref, *, block_rows, sub_rows):
    """Accumulates rows [sum(pos_loss), sum(neg_loss), num_pos] as (8,128)."""
    i = pl.program_id(1)

    @pl.when(i == 0)
    def _():
        out_ref[...] = jnp.zeros_like(out_ref)

    trips = block_rows // sub_rows

    def body(t, carry):
        pos_acc, neg_acc, cnt_acc = carry
        r0 = pl.multiple_of(t * sub_rows, sub_rows)
        x = logit_ref[pl.ds(r0, sub_rows), :].astype(jnp.float32)
        gt = gt_ref[pl.ds(r0, sub_rows), :].astype(jnp.float32)

        # Branch-free stable log-sigmoid:
        #   log(sigmoid(x))     = min(x, 0) - log(1 + exp(-|x|))
        #   log(1 - sigmoid(x)) = -max(x, 0) - log(1 + exp(-|x|))
        z = jnp.exp(-jnp.abs(x))
        log1pz = jnp.log(1.0 + z)
        log_pred = jnp.minimum(x, 0.0) - log1pz
        log_one_minus = -jnp.maximum(x, 0.0) - log1pz
        # torch.clamp(pred, 1e-12): clamp log(pred) and recover the clamped
        # pred on the EUP (no approx reciprocal -> bit-closer to reference).
        log_pred = jnp.maximum(log_pred, _LOG_CLAMP)
        pred = jnp.exp(log_pred)

        pos_inds = (gt == 1.0).astype(jnp.float32)
        neg_inds = (gt < 1.0).astype(jnp.float32)
        omg = 1.0 - gt
        sq = omg * omg
        neg_w = sq * sq                            # (1 - gt) ** 4

        omp = 1.0 - pred
        pos_loss = log_pred * (omp * omp) * pos_inds
        neg_loss = log_one_minus * (pred * pred) * (neg_w * neg_inds)

        return (pos_acc + _fold(pos_loss, sub_rows),
                neg_acc + _fold(neg_loss, sub_rows),
                cnt_acc + _fold(pos_inds, sub_rows))

    zero = jnp.zeros((8, LANES), jnp.float32)
    pos_acc, neg_acc, cnt_acc = lax.fori_loop(
        0, trips, body, (zero, zero, zero), unroll=(trips <= 8))

    out_ref[0:8, :] += pos_acc
    out_ref[8:16, :] += neg_acc
    out_ref[16:24, :] += cnt_acc


def _smooth_l1_kernel(*refs, beta, block_rows, sub_rows, num_pairs):
    """Accumulates [sum(loss_p), sum(mask_p)] rows for each (pred, tgt) pair."""
    out_ref = refs[2 * num_pairs]
    i = pl.program_id(1)

    @pl.when(i == 0)
    def _():
        out_ref[...] = jnp.zeros_like(out_ref)

    trips = block_rows // sub_rows

    def body(t, carry):
        r0 = pl.multiple_of(t * sub_rows, sub_rows)
        new = []
        for p in range(num_pairs):
            pred = refs[2 * p][pl.ds(r0, sub_rows), :].astype(jnp.float32)
            tgt = refs[2 * p + 1][pl.ds(r0, sub_rows), :].astype(jnp.float32)
            mask = (tgt > 0.0).astype(jnp.float32)
            n = jnp.abs(pred - tgt) * mask
            if beta < 1e-5:
                loss = n
            else:
                loss = jnp.where(n < beta, (0.5 / beta) * (n * n),
                                 n - 0.5 * beta)
            # The PyTorch weight_mask branch multiplies by the target-derived
            # mask again; `loss` is already zero wherever mask == 0, so that
            # multiply is algebraically a no-op and is omitted.
            new.append(carry[2 * p] + _fold(loss, sub_rows))
            new.append(carry[2 * p + 1] + _fold(mask, sub_rows))
        return tuple(new)

    zero = jnp.zeros((8, LANES), jnp.float32)
    acc = lax.fori_loop(0, trips, body,
                        tuple(zero for _ in range(2 * num_pairs)),
                        unroll=(trips <= 8))
    for k in range(2 * num_pairs):
        out_ref[k * 8:(k + 1) * 8, :] += acc[k]


# --------------------------------------------------------------------------
# pallas_call wrappers
# --------------------------------------------------------------------------
def _in_index(c, i, *, spc):
    return (c * spc + i, 0)


def _launch(kernel, tiled_inputs, block_rows, ncores, steps_per_core,
            num_out, vmem_cap):
    io_bytes = sum(2 * block_rows * LANES * jnp.dtype(t.dtype).itemsize
                   for t in tiled_inputs)
    vmem_limit = int(min(vmem_cap, max(32 << 20, io_bytes + (8 << 20))))
    in_spec = pl.BlockSpec((block_rows, LANES),
                           functools.partial(_in_index, spc=steps_per_core))
    out = pl.pallas_call(
        kernel,
        out_shape=jax.ShapeDtypeStruct((ncores * num_out * 8, LANES),
                                       jnp.float32),
        grid_spec=pltpu.PrefetchScalarGridSpec(
            num_scalar_prefetch=0,
            grid=(ncores, steps_per_core),
            in_specs=[in_spec] * len(tiled_inputs),
            out_specs=pl.BlockSpec((num_out * 8, LANES), lambda c, i: (c, 0)),
        ),
        compiler_params=pltpu.CompilerParams(
            dimension_semantics=("parallel", "arbitrary"),
            vmem_limit_bytes=vmem_limit),
    )(*tiled_inputs)
    # Tiny final cross-core / cross-lane reduce in plain JAX.
    return out.reshape(ncores, num_out, 8, LANES).sum(axis=(0, 2, 3))


def _focal_sums(logits, gt, caps):
    # Pad values: logits -> 0.0 (harmless), gt -> 2.0 (pos_inds=neg_inds=0).
    tiled, br, sub, ncores, spc = _prep_group(
        [logits, gt], [0.0, 2.0], caps["focal_rows"])
    kern = functools.partial(_focal_kernel, block_rows=br, sub_rows=sub)
    return _launch(kern, tiled, br, ncores, spc, 3, caps["vmem_cap"])


def _smooth_l1_sums(pairs, beta, caps):
    tensors, pads = [], []
    for pred, tgt in pairs:
        tensors += [pred, tgt]
        pads += [0.0, 0.0]                    # tgt pad 0.0 -> mask = 0
    tiled, br, sub, ncores, spc = _prep_group(tensors, pads, caps["sl1_rows"])
    kern = functools.partial(_smooth_l1_kernel, beta=float(beta),
                             block_rows=br, sub_rows=sub, num_pairs=len(pairs))
    return _launch(kern, tiled, br, ncores, spc, 2 * len(pairs),
                   caps["vmem_cap"])


def centernet_loss_v2(prediction_features, prediction_sizemap,
                      prediction_offsetmap, label_heatmap, label_sizemap,
                      label_offsetmap, label_weight_mask,
                      lambda_offset=1.0, lambda_size=0.1, beta=1.0):
    caps = _chip_caps()

    # --- modified focal loss on sigmoid(prediction_features) vs heatmap ---
    f = _focal_sums(prediction_features, label_heatmap, caps)
    pos_loss, neg_loss, num_pos = f[0], f[1], f[2]
    safe_den = jnp.where(num_pos == 0, 1.0, num_pos)
    sum_class_loss = jnp.where(num_pos == 0,
                               -neg_loss,
                               -(pos_loss + neg_loss) / safe_den)

    # --- modified smooth-L1 on sizemap + offsetmap (fused when shapes agree).
    # label_weight_mask only triggers a multiply by the target-derived mask in
    # the reference, which is a provable no-op, so it never reaches the kernel.
    if prediction_sizemap.size == prediction_offsetmap.size:
        s = _smooth_l1_sums(
            [(prediction_sizemap, label_sizemap),
             (prediction_offsetmap, label_offsetmap)], beta, caps)
        sum_size_loss = s[0] / (s[1] + 0.0001)
        sum_offset_loss = s[2] / (s[3] + 0.0001)
    else:
        s = _smooth_l1_sums([(prediction_sizemap, label_sizemap)], beta, caps)
        o = _smooth_l1_sums([(prediction_offsetmap, label_offsetmap)],
                            beta, caps)
        sum_size_loss = s[0] / (s[1] + 0.0001)
        sum_offset_loss = o[0] / (o[1] + 0.0001)

    return (sum_class_loss
            + sum_size_loss * lambda_size
            + sum_offset_loss * lambda_offset)


# --------------------------------------------------------------------------
# Pure-JAX reference (for a quiet self-check)
# --------------------------------------------------------------------------
def _reference_loss(pf, ps, po, lh, ls, lo, lw,
                    lambda_offset=1.0, lambda_size=0.1, beta=1.0):
    pred = jnp.maximum(jax.nn.sigmoid(pf), 1e-12)
    pos = (lh == 1.0).astype(jnp.float32)
    neg = (lh < 1.0).astype(jnp.float32)
    nw = (1.0 - lh) ** 4
    pos_loss = jnp.sum(jnp.log(pred) * (1.0 - pred) ** 2 * pos)
    neg_loss = jnp.sum(jnp.log(1.0 - pred) * pred ** 2 * nw * neg)
    num_pos = jnp.sum(pos)
    cls = jnp.where(num_pos == 0, -neg_loss,
                    -(pos_loss + neg_loss) / jnp.where(num_pos == 0, 1.0,
                                                       num_pos))

    def sl1(i, t):
        m = (t > 0).astype(jnp.float32)
        n = jnp.abs(i - t) * m
        if beta < 1e-5:
            l = n
        else:
            l = jnp.where(n < beta, 0.5 * n * n / beta, n - 0.5 * beta)
        l = l * m
        return jnp.sum(l) / (jnp.sum(m) + 0.0001)

    return cls + sl1(ps, ls) * lambda_size + sl1(po, lo) * lambda_offset


# --------------------------------------------------------------------------
# Example run
# --------------------------------------------------------------------------
if __name__ == "__main__":
    key = jax.random.PRNGKey(0)
    ks = jax.random.split(key, 8)
    B, C, H, W = 2, 4, 16, 16          # heatmap channels = C, size/offset = 2

    prediction_features = jax.random.normal(ks[0], (B, C, H, W), jnp.float32)
    prediction_sizemap = jax.random.normal(ks[1], (B, 2, H, W), jnp.float32)
    prediction_offsetmap = jax.random.normal(ks[2], (B, 2, H, W), jnp.float32)

    heat = jax.random.uniform(ks[3], (B, C, H, W), jnp.float32, 0.0, 0.99)
    peaks = jax.random.uniform(ks[4], (B, C, H, W)) > 0.97
    label_heatmap = jnp.where(peaks, 1.0, heat)

    valid = jax.random.uniform(ks[5], (B, 2, H, W)) > 0.7
    label_sizemap = jnp.where(
        valid, jax.random.uniform(ks[6], (B, 2, H, W), minval=0.1, maxval=5.0),
        0.0)
    label_offsetmap = jnp.where(
        valid, jax.random.uniform(ks[7], (B, 2, H, W), minval=0.01, maxval=1.0),
        0.0)
    label_weight_mask = valid.astype(jnp.float32)

    loss = centernet_loss_v2(prediction_features, prediction_sizemap,
                             prediction_offsetmap, label_heatmap,
                             label_sizemap, label_offsetmap,
                             label_weight_mask,
                             lambda_offset=1.0, lambda_size=0.1, beta=1.0)
    loss = jax.block_until_ready(loss)

    ref = jax.block_until_ready(_reference_loss(
        prediction_features, prediction_sizemap, prediction_offsetmap,
        label_heatmap, label_sizemap, label_offsetmap, label_weight_mask,
        lambda_offset=1.0, lambda_size=0.1, beta=1.0))

    if not bool(jnp.allclose(loss, ref, rtol=2e-3, atol=1e-4)):
        raise SystemExit(f"mismatch: kernel={float(loss)} ref={float(ref)}")
    print("KERNEL_OK")
</pallas_src>

<mosaic_0001>
module attributes {stable_mosaic.version = 11 : i64} {
  func.func @_focal_kernel(%arg0: i32, %arg1: i32, %arg2: memref<8x128xf32, #tpu.memory_space<vmem>>, %arg3: memref<8x128xf32, #tpu.memory_space<vmem>>, %arg4: memref<24x128xf32, #tpu.memory_space<vmem>>) attributes {dimension_semantics = [#tpu.dimension_semantics<parallel>, #tpu.dimension_semantics<arbitrary>], iteration_bounds = array<i64: 2, 1>, scalar_prefetch = 0 : i64, scratch_operands = 0 : i64, tpu.core_type = #tpu.core_type<tc>, window_params = [{transform_indices = @transform_0, window_bounds = array<i64: 8, 128>}, {transform_indices = @transform_1, window_bounds = array<i64: 8, 128>}, {transform_indices = @transform_2, window_bounds = array<i64: 24, 128>}]} {
    %c0_i32 = arith.constant 0 : i32
    %0 = arith.cmpi eq, %arg1, %c0_i32 : i32
    %1 = arith.extui %0 : i1 to i32
    %c0_i32_0 = arith.constant 0 : i32
    %2 = arith.cmpi ne, %1, %c0_i32_0 : i32
    scf.if %2 {
      %cst_26 = arith.constant 0.000000e+00 : f32
      %67 = vector.broadcast %cst_26 : f32 to vector<24x128xf32>
      %c0_27 = arith.constant 0 : index
      %c0_28 = arith.constant 0 : index
      %68 = vector.load %arg4[%c0_27, %c0_28] : memref<24x128xf32, #tpu.memory_space<vmem>>, vector<24x128xf32>
      tpu.vector_store %arg4[%c0_27, %c0_28], %67 {strides = array<i32>} : memref<24x128xf32, #tpu.memory_space<vmem>>, vector<24x128xf32>,
    } else {
    }
    %cst = arith.constant 0.000000e+00 : f32
    %3 = vector.broadcast %cst : f32 to vector<8x128xf32>
    %c0_i32_1 = arith.constant 0 : i32
    %c8_i32 = arith.constant 8 : i32
    %4 = arith.muli %c0_i32_1, %c8_i32 : i32
    %5 = tpu.assume_multiple %4, 8 : i32
    %6 = arith.index_cast %5 : i32 to index
    %c0 = arith.constant 0 : index
    %7 = vector.load %arg2[%6, %c0] : memref<8x128xf32, #tpu.memory_space<vmem>>, vector<8x128xf32>
    %8 = arith.index_cast %5 : i32 to index
    %c0_2 = arith.constant 0 : index
    %9 = vector.load %arg3[%8, %c0_2] : memref<8x128xf32, #tpu.memory_space<vmem>>, vector<8x128xf32>
    %10 = math.absf %7 : vector<8x128xf32>
    %cst_3 = arith.constant 0.000000e+00 : f32
    %11 = vector.broadcast %cst_3 : f32 to vector<8x128xf32>
    %12 = arith.subf %11, %10 : vector<8x128xf32>
    %13 = math.exp %12 : vector<8x128xf32>
    %cst_4 = arith.constant 1.000000e+00 : f32
    %14 = vector.broadcast %cst_4 : f32 to vector<8x128xf32>
    %15 = arith.addf %14, %13 : vector<8x128xf32>
    %16 = math.log %15 : vector<8x128xf32>
    %cst_5 = arith.constant 0.000000e+00 : f32
    %17 = vector.broadcast %cst_5 : f32 to vector<8x128xf32>
    %18 = arith.minimumf %7, %17 : vector<8x128xf32>
    %19 = arith.subf %18, %16 : vector<8x128xf32>
    %cst_6 = arith.constant 0.000000e+00 : f32
    %20 = vector.broadcast %cst_6 : f32 to vector<8x128xf32>
    %21 = arith.maximumf %7, %20 : vector<8x128xf32>
    %cst_7 = arith.constant 0.000000e+00 : f32
    %22 = vector.broadcast %cst_7 : f32 to vector<8x128xf32>
    %23 = arith.subf %22, %21 : vector<8x128xf32>
    %24 = arith.subf %23, %16 : vector<8x128xf32>
    %cst_8 = arith.constant -27.6310215 : f32
    %25 = vector.broadcast %cst_8 : f32 to vector<8x128xf32>
    %26 = arith.maximumf %19, %25 : vector<8x128xf32>
    %27 = math.exp %26 : vector<8x128xf32>
    %cst_9 = arith.constant 1.000000e+00 : f32
    %28 = vector.broadcast %cst_9 : f32 to vector<8x128xf32>
    %29 = arith.cmpf oeq, %9, %28 : vector<8x128xf32>
    %30 = arith.extui %29 : vector<8x128xi1> to vector<8x128xi32>
    %31 = arith.sitofp %30 : vector<8x128xi32> to vector<8x128xf32>
    %cst_10 = arith.constant 1.000000e+00 : f32
    %32 = vector.broadcast %cst_10 : f32 to vector<8x128xf32>
    %33 = arith.cmpf olt, %9, %32 : vector<8x128xf32>
    %34 = arith.extui %33 : vector<8x128xi1> to vector<8x128xi32>
    %35 = arith.sitofp %34 : vector<8x128xi32> to vector<8x128xf32>
    %cst_11 = arith.constant 1.000000e+00 : f32
    %36 = vector.broadcast %cst_11 : f32 to vector<8x128xf32>
    %37 = arith.subf %36, %9 : vector<8x128xf32>
    %38 = arith.mulf %37, %37 : vector<8x128xf32>
    %39 = arith.mulf %38, %38 : vector<8x128xf32>
    %cst_12 = arith.constant 1.000000e+00 : f32
    %40 = vector.broadcast %cst_12 : f32 to vector<8x128xf32>
    %41 = arith.subf %40, %27 : vector<8x128xf32>
    %42 = arith.mulf %41, %41 : vector<8x128xf32>
    %43 = arith.mulf %26, %42 : vector<8x128xf32>
    %44 = arith.mulf %43, %31 : vector<8x128xf32>
    %45 = arith.mulf %27, %27 : vector<8x128xf32>
    %46 = arith.mulf %24, %45 : vector<8x128xf32>
    %47 = arith.mulf %39, %35 : vector<8x128xf32>
    %48 = arith.mulf %46, %47 : vector<8x128xf32>
    %49 = vector.shape_cast %44 : vector<8x128xf32> to vector<1x8x128xf32>
    %cst_13 = arith.constant dense<0.000000e+00> : vector<8x128xf32>
    %50 = vector.multi_reduction <add>, %49, %cst_13 [0] : vector<1x8x128xf32> to vector<8x128xf32>
    %51 = arith.addf %3, %50 : vector<8x128xf32>
    %52 = vector.shape_cast %48 : vector<8x128xf32> to vector<1x8x128xf32>
    %cst_14 = arith.constant dense<0.000000e+00> : vector<8x128xf32>
    %53 = vector.multi_reduction <add>, %52, %cst_14 [0] : vector<1x8x128xf32> to vector<8x128xf32>
    %54 = arith.addf %3, %53 : vector<8x128xf32>
    %55 = vector.shape_cast %31 : vector<8x128xf32> to vector<1x8x128xf32>
    %cst_15 = arith.constant dense<0.000000e+00> : vector<8x128xf32>
    %56 = vector.multi_reduction <add>, %55, %cst_15 [0] : vector<1x8x128xf32> to vector<8x128xf32>
    %57 = arith.addf %3, %56 : vector<8x128xf32>
    %c1_i32 = arith.constant 1 : i32
    %c0_16 = arith.constant 0 : index
    %c0_17 = arith.constant 0 : index
    %58 = vector.load %arg4[%c0_16, %c0_17] : memref<24x128xf32, #tpu.memory_space<vmem>>, vector<8x128xf32>
    %59 = arith.addf %58, %51 : vector<8x128xf32>
    %c0_18 = arith.constant 0 : index
    %c0_19 = arith.constant 0 : index
    %60 = vector.load %arg4[%c0_18, %c0_19] : memref<24x128xf32, #tpu.memory_space<vmem>>, vector<8x128xf32>
    tpu.vector_store %arg4[%c0_18, %c0_19], %59 {strides = array<i32>} : memref<24x128xf32, #tpu.memory_space<vmem>>, vector<8x128xf32>,
    %c8 = arith.constant 8 : index
    %c0_20 = arith.constant 0 : index
    %61 = vector.load %arg4[%c8, %c0_20] : memref<24x128xf32, #tpu.memory_space<vmem>>, vector<8x128xf32>
    %62 = arith.addf %61, %54 : vector<8x128xf32>
    %c8_21 = arith.constant 8 : index
    %c0_22 = arith.constant 0 : index
    %63 = vector.load %arg4[%c8_21, %c0_22] : memref<24x128xf32, #tpu.memory_space<vmem>>, vector<8x128xf32>
    tpu.vector_store %arg4[%c8_21, %c0_22], %62 {strides = array<i32>} : memref<24x128xf32, #tpu.memory_space<vmem>>, vector<8x128xf32>,
    %c16 = arith.constant 16 : index
    %c0_23 = arith.constant 0 : index
    %64 = vector.load %arg4[%c16, %c0_23] : memref<24x128xf32, #tpu.memory_space<vmem>>, vector<8x128xf32>
    %65 = arith.addf %64, %57 : vector<8x128xf32>
    %c16_24 = arith.constant 16 : index
    %c0_25 = arith.constant 0 : index
    %66 = vector.load %arg4[%c16_24, %c0_25] : memref<24x128xf32, #tpu.memory_space<vmem>>, vector<8x128xf32>
    tpu.vector_store %arg4[%c16_24, %c0_25], %65 {strides = array<i32>} : memref<24x128xf32, #tpu.memory_space<vmem>>, vector<8x128xf32>,
    return
  }
  func.func @transform_0(%arg0: i32, %arg1: i32) -> (i32, i32) {
    %c1_i32 = arith.constant 1 : i32
    %0 = arith.muli %arg0, %c1_i32 : i32
    %1 = arith.addi %0, %arg1 : i32
    %c0_i32 = arith.constant 0 : i32
    %c0_i32_0 = arith.constant 0 : i32
    return %1, %c0_i32 : i32, i32
  }
  func.func @transform_1(%arg0: i32, %arg1: i32) -> (i32, i32) {
    %c1_i32 = arith.constant 1 : i32
    %0 = arith.muli %arg0, %c1_i32 : i32
    %1 = arith.addi %0, %arg1 : i32
    %c0_i32 = arith.constant 0 : i32
    %c0_i32_0 = arith.constant 0 : i32
    return %1, %c0_i32 : i32, i32
  }
  func.func @transform_2(%arg0: i32, %arg1: i32) -> (i32, i32) {
    %c0_i32 = arith.constant 0 : i32
    %c0_i32_0 = arith.constant 0 : i32
    return %arg0, %c0_i32 : i32, i32
  }
}

</mosaic_0001>

<llo_original>
// kernel: tpu_custom_call.1
$region0: #{tpu_custom_call.1}
  #allocation0 [shape = 'u32[]', space=smem, size = 0x4, offset = 0x4, fixed_abs, tag = 'smem constant byte address 0x4 - core index']
  #allocation1 [shape = 'u32[144,128]{1,0:T(1,128)}', space=vmem, size = 0x12000, scoped, tag = 'internal scratch']
  %s0 = inlined_call_operand.hbm [shape: f32[16,128], index: 0, kind: input, shape index: {}]
  %s1 = inlined_call_operand.hbm [shape: f32[16,128], index: 1, kind: input, shape index: {}]
  %s2 = inlined_call_operand.hbm [shape: f32[48,128], index: 2, kind: output, shape index: {}]
  %s3 = sld [smem:[#allocation0]]
  $region53: #{tpu_custom_call.1} parent=0
    _
  %s5 = ssub.s32 1, %s3
  %s6 = scalar_select 0, %s5, %s3
  $region1: #{tpu_custom_call.1} parent=0
    #allocation2 [shape = 'u8[8192]{0}', space=vmem, size = 0x2000, scoped, tag = 'input window, operand 0']
    #allocation3 [shape = 's32[2]{0}', space=sflag, size = 0x8, scoped, tag = 'scoped memory for tpu_custom_call.1']
    #allocation4 [shape = 's32[2]{0}', space=sflag, size = 0x8, scoped, tag = 'scoped memory for tpu_custom_call.1']
    #allocation5 [shape = 'u8[8192]{0}', space=vmem, size = 0x2000, scoped, tag = 'input window, operand 1']
    #allocation6 [shape = 's32[2]{0}', space=sflag, size = 0x8, scoped, tag = 'scoped memory for tpu_custom_call.1']
    #allocation7 [shape = 'u8[24576]{0}', space=vmem, size = 0x6000, scoped, tag = 'output window, operand 0']
    %7 = vsyncpa [#allocation3], 0
    %s8 = scalar_lea.sflag [#allocation3], 1
    %9 = vsyncpa %s8, 0
    %10 = vsyncpa [#allocation6], 0
    %s11 = scalar_lea.sflag [#allocation6], 1
    %12 = vsyncpa %s11, 0
    %13 = vsyncpa [#allocation4], 0
    %s14 = scalar_lea.sflag [#allocation4], 1
    %15 = vsyncpa %s14, 0
    loop: start=0, step=1, limit=4
    $region2: #{tpu_custom_call.1} parent=1 // loop_pre_header
      _
    $region3: #{tpu_custom_call.1} parent=1 // loop_header
      %s17 = sphi 0, %s21
      %p18 = scmp.ge.s32.totalorder %s17, 4
      %s24 = sphi 0, %s36
      %s25 = sphi 0, %s32
      %s26 = sphi 0, %s24
      %s27 = sphi 0, %s25
      %s28 = sphi 0, %s26
      %s29 = sphi 0, %s27
      %s41 = sphi 0, %s43
      %s44 = sphi 0, %s41
      %s45 = sphi 0, %s44
      %s61 = sphi 0, %s45
      %s69 = sphi 0, %s71
      %s72 = sphi 0, %s69
      %s73 = sphi 0, %s72
      %s89 = sphi 0, %s73
      %s95 = sphi 0, %s97
      %s98 = sphi 0, %s95
      %s99 = sphi 0, %s98
      %s115 = sphi 0, %s99
    $region4: #{tpu_custom_call.1} parent=1 // loop_header_branch
      %20 = sbr.rel (%p18) target = $region8
    $region5: #{tpu_custom_call.1} parent=1 // loop_body
      %s22 = ssub.s32 %s17, 1
      %s23 = ssub.s32 %s17, 2
      %s30 = sadd.s32 1, %s25
      %p31 = scmp.ge.s32.totalorder %s30, 1
      %s32 = scalar_select %p31, 0, %s30
      %s33 = sadd.s32 1, %s24
      %s34 = scalar_select %p31, %s33, %s24
      %p35 = scmp.ge.s32.totalorder %s34, 2
      %s36 = scalar_select %p35, 0, %s34
      %s37 = sadd.s32 %s24, %s25
      %s38 = sadd.s32 %s36, %s32
      %s39 = ssub.s32 %s37, %s38
      %p40 = scmp.eq.s32.totalorder %s39, 0
      %s42 = sadd.s32 %s41, 1
      %s43 = scalar_select %p40, %s41, %s42
      %p46 = pneg %p40
      %p47 = scmp.eq.s32.totalorder %s17, 1
      %p48 = por %p46, %p47
      %p49 = scmp.ne.s32.totalorder %s41, %s44
      %p50 = scmp.eq.s32.totalorder %s17, 0
      %p51 = por %p49, %p50
      %p52 = scmp.ne.s32.totalorder %s41, %s44
      %p53 = scmp.eq.s32.totalorder %s22, 1
      %p54 = por %p52, %p53
      %p55 = scmp.ne.s32.totalorder %s44, %s45
      %p56 = scmp.eq.s32.totalorder %s22, 0
      %p57 = por %p55, %p56
      %p58 = scmp.ne.s32.totalorder %s44, %s45
      %p59 = scmp.eq.s32.totalorder %s23, 1
      %p60 = por %p58, %p59
      %p62 = scmp.ne.s32.totalorder %s45, %s61
      %p63 = scmp.eq.s32.totalorder %s23, 0
      %p64 = por %p62, %p63
      %s65 = sadd.s32 %s24, %s25
      %s66 = sadd.s32 %s36, %s32
      %s67 = ssub.s32 %s65, %s66
      %p68 = scmp.eq.s32.totalorder %s67, 0
      %s70 = sadd.s32 %s69, 1
      %s71 = scalar_select %p68, %s69, %s70
      %p74 = pneg %p68
      %p75 = scmp.eq.s32.totalorder %s17, 1
      %p76 = por %p74, %p75
      %p77 = scmp.ne.s32.totalorder %s69, %s72
      %p78 = scmp.eq.s32.totalorder %s17, 0
      %p79 = por %p77, %p78
      %p80 = scmp.ne.s32.totalorder %s69, %s72
      %p81 = scmp.eq.s32.totalorder %s22, 1
      %p82 = por %p80, %p81
      %p83 = scmp.ne.s32.totalorder %s72, %s73
      %p84 = scmp.eq.s32.totalorder %s22, 0
      %p85 = por %p83, %p84
      %p86 = scmp.ne.s32.totalorder %s72, %s73
      %p87 = scmp.eq.s32.totalorder %s23, 1
      %p88 = por %p86, %p87
      %p90 = scmp.ne.s32.totalorder %s73, %s89
      %p91 = scmp.eq.s32.totalorder %s23, 0
      %p92 = por %p90, %p91
      %s93 = ssub.s32 %s24, %s36
      %p94 = scmp.eq.s32.totalorder %s93, 0
      %s96 = sadd.s32 %s95, 1
      %s97 = scalar_select %p94, %s95, %s96
      %p100 = pneg %p94
      %p101 = scmp.eq.s32.totalorder %s17, 1
      %p102 = por %p100, %p101
      %p103 = scmp.ne.s32.totalorder %s95, %s98
      %p104 = scmp.eq.s32.totalorder %s17, 0
      %p105 = por %p103, %p104
      %p106 = scmp.ne.s32.totalorder %s95, %s98
      %p107 = scmp.eq.s32.totalorder %s22, 1
      %p108 = por %p106, %p107
      %p109 = scmp.ne.s32.totalorder %s98, %s99
      %p110 = scmp.eq.s32.totalorder %s22, 0
      %p111 = por %p109, %p110
      %p112 = scmp.ne.s32.totalorder %s98, %s99
      %p113 = scmp.eq.s32.totalorder %s23, 1
      %p114 = por %p112, %p113
      %p116 = scmp.ne.s32.totalorder %s99, %s115
      %p117 = scmp.eq.s32.totalorder %s23, 0
      %p118 = por %p116, %p117
      %p119 = scmp.le.s32.totalorder 1, %s17
      %p120 = scmp.lt.s32.totalorder %s17, 3
      %p121 = pnand %p119, %p120
      %p122 = pneg %p121
      // Predicated region
      $region9: #{tpu_custom_call.1} parent=5 // pred_check
        _
      $region10: #{tpu_custom_call.1} parent=5 // pred_check_branch
        %124 = sbr.rel (%p121) target = $region12
      $region11: #{tpu_custom_call.1} parent=5 // pred_region
        %s125 = ssub.s32 %s17, 1
      $region12: #{tpu_custom_call.1} parent=5 // pred_fallthru
        _
      %p126 = scmp.lt.s32.totalorder %s17, 2
      // Predicated region
      $region13: #{tpu_custom_call.1} parent=5 // pred_check
        %p127 = pneg %p126
      $region14: #{tpu_custom_call.1} parent=5 // pred_check_branch
        %129 = sbr.rel (%p127) target = $region16
      $region15: #{tpu_custom_call.1} parent=5 // pred_region
        // Predicated region
        $region17: #{tpu_custom_call.1} parent=15 // pred_check
          %p130 = pneg %p51
        $region18: #{tpu_custom_call.1} parent=15 // pred_check_branch
          %132 = sbr.rel (%p130) target = $region20
        $region19: #{tpu_custom_call.1} parent=15 // pred_region
          %s133 = sand.u32 %s41, 1
          %s134 = scalar_lea.sflag [#allocation3], %s133
          %s135 = sand.u32 %s41, 1
          %s136 = smul.addr %s135, 8
          %s137 = scalar_lea.vmem [#allocation2], %s136
          %s138 = sadd.s32 %s24, %s25
          %s140 = ssub.s32 128, 128
          %141 = vsyncadd %s134, %s140
          %s142 = smul.addr %s138, 128
          %s143 = scalar_lea.hbm %s0, %s142
          %s145 = sshll.u32 %s137, 4
          %s146 = int_to_ptr.vmem [resolvable:$true] %s145
          %148 = dma.hbm_to_vmem [thread:$0]  %s143, 128, %s146, %s134
        $region20: #{tpu_custom_call.1} parent=15 // pred_fallthru
          _
        // Predicated region
        $region21: #{tpu_custom_call.1} parent=15 // pred_check
          %p149 = pneg %p79
        $region22: #{tpu_custom_call.1} parent=15 // pred_check_branch
          %151 = sbr.rel (%p149) target = $region24
        $region23: #{tpu_custom_call.1} parent=15 // pred_region
          %s152 = sand.u32 %s69, 1
          %s153 = scalar_lea.sflag [#allocation6], %s152
          %s154 = sand.u32 %s69, 1
          %s155 = smul.addr %s154, 8
          %s156 = scalar_lea.vmem [#allocation5], %s155
          %s157 = sadd.s32 %s24, %s25
          %s159 = ssub.s32 128, 128
          %160 = vsyncadd %s153, %s159
          %s161 = smul.addr %s157, 128
          %s162 = scalar_lea.hbm %s1, %s161
          %s164 = sshll.u32 %s156, 4
          %s165 = int_to_ptr.vmem [resolvable:$true] %s164
          %167 = dma.hbm_to_vmem [thread:$0]  %s162, 128, %s165, %s153
        $region24: #{tpu_custom_call.1} parent=15 // pred_fallthru
          _
      $region16: #{tpu_custom_call.1} parent=5 // pred_fallthru
        _
      %p168 = scmp.le.s32.totalorder 1, %s17
      %p169 = scmp.lt.s32.totalorder %s17, 3
      %p170 = pnand %p168, %p169
      %p171 = pneg %p170
      // Predicated region
      $region25: #{tpu_custom_call.1} parent=5 // pred_check
        _
      $region26: #{tpu_custom_call.1} parent=5 // pred_check_branch
        %173 = sbr.rel (%p170) target = $region28
      $region27: #{tpu_custom_call.1} parent=5 // pred_region
        %s174 = ssub.s32 %s17, 1
        %s175 = sand.u32 %s44, 1
        %s176 = scalar_lea.sflag [#allocation3], %s175
        %s177 = sand.u32 %s44, 1
        %s178 = smul.addr %s177, 8
        %s179 = scalar_lea.vmem [#allocation2], %s178
        // Predicated region
        $region29: #{tpu_custom_call.1} parent=27 // pred_check
          %p180 = pneg %p57
        $region30: #{tpu_custom_call.1} parent=27 // pred_check_branch
          %182 = sbr.rel (%p180) target = $region32
        $region31: #{tpu_custom_call.1} parent=27 // pred_region
          %183 = dma.done %s176, 128
        $region32: #{tpu_custom_call.1} parent=27 // pred_fallthru
          _
        %s184 = sand.u32 %s72, 1
        %s185 = scalar_lea.sflag [#allocation6], %s184
        %s186 = sand.u32 %s72, 1
        %s187 = smul.addr %s186, 8
        %s188 = scalar_lea.vmem [#allocation5], %s187
        // Predicated region
        $region33: #{tpu_custom_call.1} parent=27 // pred_check
          %p189 = pneg %p85
        $region34: #{tpu_custom_call.1} parent=27 // pred_check_branch
          %191 = sbr.rel (%p189) target = $region36
        $region35: #{tpu_custom_call.1} parent=27 // pred_region
          %192 = dma.done %s185, 128
        $region36: #{tpu_custom_call.1} parent=27 // pred_fallthru
          _
        %s193 = sand.u32 %s44, 1
        %s194 = scalar_lea.sflag [#allocation3], %s193
        %s195 = sand.u32 %s44, 1
        %s196 = smul.addr %s195, 8
        %s197 = scalar_lea.vmem [#allocation2], %s196
        %p198 = pneg %p57
        %p199 = pneg %p54
        %s200 = sand.u32 %s72, 1
        %s201 = scalar_lea.sflag [#allocation6], %s200
        %s202 = sand.u32 %s72, 1
        %s203 = smul.addr %s202, 8
        %s204 = scalar_lea.vmem [#allocation5], %s203
        %p205 = pneg %p85
        %p206 = pneg %p82
        %p207 = pneg %p111
        %p208 = pneg %p108
        %s209 = sand.u32 %s98, 1
        %s210 = scalar_lea.sflag [#allocation4], %s209
        %s211 = sand.u32 %s98, 1
        %s212 = smul.addr %s211, 24
        %s213 = scalar_lea.vmem [#allocation7], %s212
        %s214 = sadd.s32 %s26, %s27
        %s215 = sadd.s32 %s26, %s27
        %s216 = smul.u32 3, %s26
        %p217 = scmp.eq.s32.totalorder %s27, 0
        // Predicated region
        $region37: #{tpu_custom_call.1} parent=27 // pred_check
          %p218 = pneg %p217
        $region38: #{tpu_custom_call.1} parent=27 // pred_check_branch
          %220 = sbr.rel (%p218) target = $region40
        $region39: #{tpu_custom_call.1} parent=27 // pred_region
          %221 = vst [vmem:[%s213] sm:$0xff] 0.0
          %222 = vst [vmem:[%s213 + $0x8] sm:$0xff] 0.0
          %223 = vst [vmem:[%s213 + $0x10] sm:$0xff] 0.0
        $region40: #{tpu_custom_call.1} parent=27 // pred_fallthru
          _
        %v224 = vld [vmem:[%s179] sm:$0xff]
        %v225 = vld [vmem:[%s188] sm:$0xff]
        %v226 = vand.u32 2147483647, %v224
        %v227 = vsub.f32 0.0, %v226
        %v228 = vmul.f32 %v227, 1.442695
        %v229 = vpow.pop %v228
        %v230 = vadd.f32 %v229, 1.0
        %v231 = vlog2.pop %v230
        %v232 = vmul.f32 %v231, 0.6931472
        %v233 = vmin.f32 %v224, 0.0
        %v234 = vsub.f32 %v233, %v232
        %v235 = vmax.f32 %v224, 0.0
        %v236 = vsub.f32 0.0, %v235
        %v237 = vsub.f32 %v236, %v232
        %v238 = vmax.f32 %v234, -27.631021
        %v239 = vmul.f32 %v238, 1.442695
        %v240 = vpow.pop %v239
        %vm241 = vcmp.eq.f32.partialorder %v225, 1.0
        %v242 = vsel %vm241, 1, 0
        %v243 = vcvt.s32.f32 %v242
        %vm244 = vcmp.lt.f32.partialorder %v225, 1.0
        %v245 = vsel %vm244, 1, 0
        %v246 = vcvt.s32.f32 %v245
        %v247 = vsub.f32 1.0, %v225
        %v248 = vmul.f32 %v247, %v247
        %v249 = vmul.f32 %v248, %v248
        %v250 = vsub.f32 1.0, %v240
        %v251 = vmul.f32 %v250, %v250
        %v252 = vmul.f32 %v238, %v251
        %v253 = vmul.f32 %v252, %v243
        %v254 = vmul.f32 %v240, %v240
        %v255 = vmul.f32 %v237, %v254
        %v256 = vmul.f32 %v249, %v246
        %v257 = vmul.f32 %v255, %v256
        %v258 = vadd.f32 %v253, 0.0
        %v259 = vadd.f32 %v258, 0.0
        %v260 = vadd.f32 %v257, 0.0
        %v261 = vadd.f32 %v260, 0.0
        %v262 = vadd.f32 %v243, 0.0
        %v263 = vadd.f32 %v262, 0.0
        %v264 = vld [vmem:[%s213] sm:$0xff]
        %v265 = vadd.f32 %v264, %v259
        %266 = vst [vmem:[%s213] sm:$0xff] %v265
        %v267 = vld [vmem:[%s213 + $0x8] sm:$0xff]
        %v268 = vadd.f32 %v267, %v261
        %269 = vst [vmem:[%s213 + $0x8] sm:$0xff] %v268
        %v270 = vld [vmem:[%s213 + $0x10] sm:$0xff]
        %v271 = vadd.f32 %v270, %v263
        %272 = vst [vmem:[%s213 + $0x10] sm:$0xff] %v271
        %s273 = sand.u32 %s98, 1
        %s274 = scalar_lea.sflag [#allocation4], %s273
        %s275 = sand.u32 %s98, 1
        %s276 = smul.addr %s275, 24
        %s277 = scalar_lea.vmem [#allocation7], %s276
        // Predicated region
        $region41: #{tpu_custom_call.1} parent=27 // pred_check
          %p278 = pneg %p108
        $region42: #{tpu_custom_call.1} parent=27 // pred_check_branch
          %280 = sbr.rel (%p278) target = $region44
        $region43: #{tpu_custom_call.1} parent=27 // pred_region
          %s281 = smul.u32 3, %s26
          %s283 = ssub.s32 384, 384
          %284 = vsyncadd %s274, %s283
          %s285 = smul.addr %s281, 128
          %s286 = scalar_lea.hbm %s2, %s285
          %s287 = sshll.u32 %s277, 4
          %s288 = int_to_ptr.vmem [resolvable:$true] %s287
          %293 = dma.vmem_to_hbm [thread:$0]  %s288, 384, %s286, %s274, 128, 128, 8
        $region44: #{tpu_custom_call.1} parent=27 // pred_fallthru
          _
      $region28: #{tpu_custom_call.1} parent=5 // pred_fallthru
        _
      %p294 = scmp.le.s32.totalorder 2, %s17
      // Predicated region
      $region45: #{tpu_custom_call.1} parent=5 // pred_check
        %p295 = pneg %p294
      $region46: #{tpu_custom_call.1} parent=5 // pred_check_branch
        %297 = sbr.rel (%p295) target = $region48
      $region47: #{tpu_custom_call.1} parent=5 // pred_region
        %s298 = ssub.s32 %s17, 2
        // Predicated region
        $region49: #{tpu_custom_call.1} parent=47 // pred_check
          %p299 = pneg %p114
        $region50: #{tpu_custom_call.1} parent=47 // pred_check_branch
          %301 = sbr.rel (%p299) target = $region52
        $region51: #{tpu_custom_call.1} parent=47 // pred_region
          %s302 = sand.u32 %s99, 1
          %s303 = scalar_lea.sflag [#allocation4], %s302
          %s304 = sand.u32 %s99, 1
          %s305 = smul.addr %s304, 24
          %s306 = scalar_lea.vmem [#allocation7], %s305
          %307 = dma.done %s303, 384
        $region52: #{tpu_custom_call.1} parent=47 // pred_fallthru
          _
      $region48: #{tpu_custom_call.1} parent=5 // pred_fallthru
        _
    $region6: #{tpu_custom_call.1} parent=1 // loop_footer
      %s21 = sadd.s32 1, %s17
    $region7: #{tpu_custom_call.1} parent=1 // loop_footer_branch
      %16 = sbr.rel target = $region3
    $region8: #{tpu_custom_call.1} parent=1 // loop_exit
      _
    %308 = vsyncpa [#allocation3], 1
    %s309 = scalar_lea.sflag [#allocation3], 1
    %310 = vsyncpa %s309, 1
    %311 = vsyncpa [#allocation6], 1
    %s312 = scalar_lea.sflag [#allocation6], 1
    %313 = vsyncpa %s312, 1
    %314 = vsyncpa [#allocation4], 1
    %s315 = scalar_lea.sflag [#allocation4], 1
    %316 = vsyncpa %s315, 1

</llo_original>
